<compile_context>
chip_gen: v6e
topology: v6e:2x2x1
jax: 0.10.0
libtpu: 0.0.40
codegen_flags: <defaults>
</compile_context>

<pallas_src>
import math

import jax
import jax.numpy as jnp
from jax.experimental import pallas as pl
from jax.experimental.pallas import tpu as pltpu

_LANE = 128      # internal (HBM-invisible) feature dims padded to lane width
_SUBLANE = 16    # batch padded to the bf16 sublane tile (covers f32's 8 too)


def _round_up(n, m):
    return ((n + m - 1) // m) * m


# ----------------------------------------------------------------------------
# Fused kernel: (x @ W0 + b0 -> relu) -> ... -> (x @ Wl + bl [-> relu?])
# refs layout: x_ref, (w_ref, b_ref) * n_layers, o_ref.  The activation chain
# stays in vregs/VMEM; only the final (narrow) result is stored to HBM.
# ----------------------------------------------------------------------------
def _make_fused_mlp_kernel(relu_flags, sum_last):
    n_layers = len(relu_flags)

    def kernel(*refs):
        x_ref = refs[0]
        o_ref = refs[-1]
        h = x_ref[...]                                    # bf16 (tb, Din)
        for l in range(n_layers):                         # unrolled at trace time
            w_ref = refs[1 + 2 * l]                       # bf16 (K, N_pad)
            b_ref = refs[2 + 2 * l]                       # f32  (1, N_pad)
            h = jnp.dot(h.astype(jnp.bfloat16), w_ref[...],
                        preferred_element_type=jnp.float32)   # f32 accumulate
            h = h + b_ref[...]                            # bias (+ folded BN shift)
            if relu_flags[l]:
                h = jnp.maximum(h, 0.0)                   # ReLU (dropout = identity, eval)
        if sum_last:
            # Padded columns of the last layer are exactly zero (zero weight
            # columns + zero bias entries), so the lane reduction equals
            # column 0.  Shrinks the HBM writeback from (tb,128) to (tb,1).
            o_ref[...] = jnp.sum(h, axis=-1, keepdims=True).astype(o_ref.dtype)
        else:
            o_ref[...] = h.astype(o_ref.dtype)

    return kernel


def fused_mlp_forward(x, folded_params, relu_flags, out_dim, tile_b=512):
    """Run the whole MLP in a single pallas_call.

    folded_params: list of (W_padded_bf16, b_padded_f32) with BN folded into
    the hidden layers; internal feature dims are lane-padded, the first
    layer's K dim matches the raw input_dim.
    """
    B, Din = x.shape
    assert folded_params[0][0].shape[0] == Din
    Dout_pad = folded_params[-1][0].shape[1]
    sum_last = (out_dim == 1)
    out_cols = 1 if sum_last else Dout_pad

    # Batch padding / tiling: pad only to the sublane tile (not to a full
    # multiple of tb); the ragged last tile is masked by Pallas.  Big tiles
    # (>=512) amortize the per-grid-step overhead.
    B_pad = _round_up(max(B, _SUBLANE), _SUBLANE)
    tb = min(_round_up(tile_b, _SUBLANE), B_pad)
    n_b = pl.cdiv(B_pad, tb)

    # x is the only batch-sized HBM input: keep its feature dim unpadded and
    # store it as bf16 (halves the dominant HBM read for large B).
    x_pad = jnp.zeros((B_pad, Din), jnp.bfloat16).at[:B, :].set(
        x.astype(jnp.bfloat16))

    flat_params = []
    for w, b in folded_params:
        flat_params.extend((w, b))

    def build_specs(single_buffer_weights):
        in_specs = [pl.BlockSpec((tb, Din), lambda i: (i, 0))]
        for w, _ in folded_params:
            din_l, dout_l = w.shape
            if single_buffer_weights:
                # Grid-invariant operands: single buffer -> half the resident
                # weight VMEM (critical on v7x's 64 MiB VMEM, v5e's 16 MiB
                # default scoped limit).
                in_specs.append(pl.BlockSpec((din_l, dout_l), lambda i: (0, 0),
                                             pipeline_mode=pl.Buffered(1)))
                in_specs.append(pl.BlockSpec((1, dout_l), lambda i: (0, 0),
                                             pipeline_mode=pl.Buffered(1)))
            else:
                in_specs.append(pl.BlockSpec((din_l, dout_l), lambda i: (0, 0)))
                in_specs.append(pl.BlockSpec((1, dout_l), lambda i: (0, 0)))
        out_specs = pl.BlockSpec((tb, out_cols), lambda i: (i, 0))
        return in_specs, out_specs

    # VMEM budget: x tile (x2 buffers) + out tile (x2) + resident params
    # + intermediate activation slabs; clamp under the tightest physical VMEM
    # (v7x: 64 MiB) but never below the default scoped limits.
    max_n = max(w.shape[1] for w, _ in folded_params)
    param_bytes = sum(w.size * w.dtype.itemsize + b.size * b.dtype.itemsize
                      for w, b in folded_params)
    act_bytes = 3 * tb * max_n * 4
    est = 2 * tb * Din * 2 + 2 * tb * out_cols * 4 + 2 * param_bytes + act_bytes
    vmem_limit = int(min(max(2 * est, 32 << 20), 48 << 20))

    flops = sum(2 * B_pad * w.shape[0] * w.shape[1] for w, _ in folded_params)
    bytes_accessed = int(x_pad.size * 2 + param_bytes + B_pad * out_cols * 4)

    def run(single_buffer_weights):
        in_specs, out_specs = build_specs(single_buffer_weights)
        return pl.pallas_call(
            _make_fused_mlp_kernel(relu_flags, sum_last),
            out_shape=jax.ShapeDtypeStruct((B_pad, out_cols), jnp.float32),
            grid=(n_b,),
            in_specs=in_specs,
            out_specs=out_specs,
            compiler_params=pltpu.CompilerParams(
                dimension_semantics=("parallel",),
                vmem_limit_bytes=vmem_limit),
            cost_estimate=pl.CostEstimate(
                flops=flops, transcendentals=0,
                bytes_accessed=bytes_accessed),
        )(x_pad, *flat_params)

    try:
        out_pad = run(single_buffer_weights=True)
    except Exception:
        # Fallback if this Pallas build rejects Buffered(1) single-buffering.
        out_pad = run(single_buffer_weights=False)

    return out_pad[:B, :out_dim]


# ----------------------------------------------------------------------------
# Parameter construction (mirrors nn.Linear / nn.BatchNorm1d shapes) and the
# offline BN-fold + lane-pad + bf16-cast preprocessing.
# ----------------------------------------------------------------------------
def init_mlp_params(key, input_dim, hidden_dims, output_layer=True):
    """Raw (unfolded, unpadded, f32) parameters."""
    params = []
    d_in = input_dim
    for d_out in hidden_dims:
        key, kw, kb, kg, kbeta, km, kv = jax.random.split(key, 7)
        bound = 1.0 / math.sqrt(d_in)
        w = jax.random.uniform(kw, (d_in, d_out), jnp.float32, -bound, bound)
        b = jax.random.uniform(kb, (1, d_out), jnp.float32, -bound, bound)
        gamma = 1.0 + 0.1 * jax.random.normal(kg, (1, d_out), jnp.float32)
        beta = 0.1 * jax.random.normal(kbeta, (1, d_out), jnp.float32)
        running_mean = 0.1 * jax.random.normal(km, (1, d_out), jnp.float32)
        running_var = 1.0 + 0.1 * jax.random.uniform(kv, (1, d_out), jnp.float32)
        params.append(("hidden", w, b, gamma, beta, running_mean, running_var))
        d_in = d_out
    if output_layer:
        key, kw, kb = jax.random.split(key, 3)
        bound = 1.0 / math.sqrt(d_in)
        w = jax.random.uniform(kw, (d_in, 1), jnp.float32, -bound, bound)
        b = jax.random.uniform(kb, (1, 1), jnp.float32, -bound, bound)
        params.append(("output", w, b))
    return params


def fold_and_pad_params(params, eps=1e-5):
    """Fold eval-mode BatchNorm1d into each hidden Linear, zero-pad feature
    dims to lane width (except the HBM-facing input dim of the first layer),
    and cast weights to bf16 (biases stay f32; matmuls accumulate in f32).

    Padded weight rows/cols and bias entries are zero, so padded activation
    columns stay exactly zero through every layer (this also makes the final
    lane-sum writeback exact).
    """
    folded, relu_flags = [], []
    for idx, layer in enumerate(params):
        if layer[0] == "hidden":
            _, w, b, gamma, beta, mean, var = layer
            scale = gamma / jnp.sqrt(var + eps)           # (1, Dout)
            w = w * scale                                 # fold BN scale into W
            b = b * scale + (beta - mean * scale)         # fold BN shift into b
            relu_flags.append(True)
        else:
            _, w, b = layer
            relu_flags.append(False)
        din, dout = w.shape
        # First layer reads x straight from HBM: leave its K dim unpadded so
        # x traffic stays B*din instead of B*round_up(din, 128).
        din_p = din if idx == 0 else _round_up(din, _LANE)
        dout_p = _round_up(dout, _LANE)
        w_p = jnp.zeros((din_p, dout_p), jnp.float32).at[:din, :dout].set(w)
        b_p = jnp.zeros((1, dout_p), jnp.float32).at[:, :dout].set(b)
        folded.append((w_p.astype(jnp.bfloat16), b_p))
    return folded, tuple(relu_flags)


def mlp_reference(x, params, eps=1e-5):
    """Pure-JAX f32 reference with un-folded BatchNorm (eval mode)."""
    h = x
    for layer in params:
        if layer[0] == "hidden":
            _, w, b, gamma, beta, mean, var = layer
            y = h @ w + b
            y = (y - mean) / jnp.sqrt(var + eps) * gamma + beta
            h = jnp.maximum(y, 0.0)
        else:
            _, w, b = layer
            h = h @ w + b
    return h


if __name__ == "__main__":
    key = jax.random.PRNGKey(0)
    batch = 8
    input_dim = 32
    hidden_dims = [64, 32]
    dropout = 0.2  # identity in eval mode

    key, kx, kp = jax.random.split(key, 3)
    x = jax.random.normal(kx, (batch, input_dim), jnp.float32)
    params = init_mlp_params(kp, input_dim, hidden_dims, output_layer=True)
    folded, relu_flags = fold_and_pad_params(params)

    out = fused_mlp_forward(x, folded, relu_flags, out_dim=1)
    out = jax.block_until_ready(out)

    ref = mlp_reference(x, params)
    assert out.shape == (batch, 1), out.shape
    # bf16 weights/activations vs f32 reference -> loosened tolerance.
    assert jnp.allclose(out, ref, atol=5e-2, rtol=5e-2), (out, ref)

    print("KERNEL_OK")
</pallas_src>

<mosaic_0001>
module attributes {stable_mosaic.version = 11 : i64} {
  func.func @kernel(%arg0: i32, %arg1: memref<16x32xbf16, #tpu.memory_space<vmem>>, %arg2: memref<32x128xbf16, #tpu.memory_space<vmem>>, %arg3: memref<1x128xf32, #tpu.memory_space<vmem>>, %arg4: memref<128x128xbf16, #tpu.memory_space<vmem>>, %arg5: memref<1x128xf32, #tpu.memory_space<vmem>>, %arg6: memref<128x128xbf16, #tpu.memory_space<vmem>>, %arg7: memref<1x128xf32, #tpu.memory_space<vmem>>, %arg8: memref<16x1xf32, #tpu.memory_space<vmem>>) attributes {dimension_semantics = [#tpu.dimension_semantics<parallel>], iteration_bounds = array<i64: 1>, scalar_prefetch = 0 : i64, scratch_operands = 0 : i64, tpu.core_type = #tpu.core_type<tc>, window_params = [{transform_indices = @transform_0, window_bounds = array<i64: 16, 32>}, {pipeline_mode = #tpu.pipeline_mode<synchronous>, transform_indices = @transform_1, window_bounds = array<i64: 32, 128>}, {pipeline_mode = #tpu.pipeline_mode<synchronous>, transform_indices = @transform_2, window_bounds = array<i64: 1, 128>}, {pipeline_mode = #tpu.pipeline_mode<synchronous>, transform_indices = @transform_3, window_bounds = array<i64: 128, 128>}, {pipeline_mode = #tpu.pipeline_mode<synchronous>, transform_indices = @transform_4, window_bounds = array<i64: 1, 128>}, {pipeline_mode = #tpu.pipeline_mode<synchronous>, transform_indices = @transform_5, window_bounds = array<i64: 128, 128>}, {pipeline_mode = #tpu.pipeline_mode<synchronous>, transform_indices = @transform_6, window_bounds = array<i64: 1, 128>}, {transform_indices = @transform_7, window_bounds = array<i64: 16, 1>}]} {
    %c0 = arith.constant 0 : index
    %c0_0 = arith.constant 0 : index
    %0 = vector.load %arg1[%c0, %c0_0] : memref<16x32xbf16, #tpu.memory_space<vmem>>, vector<16x32xbf16>
    %c0_1 = arith.constant 0 : index
    %c0_2 = arith.constant 0 : index
    %1 = vector.load %arg2[%c0_1, %c0_2] : memref<32x128xbf16, #tpu.memory_space<vmem>>, vector<32x128xbf16>
    %cst = arith.constant dense<0.000000e+00> : vector<16x128xf32>
    %2 = tpu.matmul %0, %1, %cst {dimension_numbers = #tpu.dot_dimension_numbers<[1], [0], [0], [1], [0, 0, 1, 1], [], []>} : vector<16x32xbf16>, vector<32x128xbf16>, vector<16x128xf32> -> vector<16x128xf32>
    %c0_3 = arith.constant 0 : index
    %c0_4 = arith.constant 0 : index
    %3 = vector.load %arg3[%c0_3, %c0_4] : memref<1x128xf32, #tpu.memory_space<vmem>>, vector<1x128xf32>
    %4 = vector.broadcast %3 : vector<1x128xf32> to vector<16x128xf32>
    %5 = arith.addf %2, %4 : vector<16x128xf32>
    %cst_5 = arith.constant 0.000000e+00 : f32
    %6 = vector.broadcast %cst_5 : f32 to vector<16x128xf32>
    %7 = arith.maximumf %5, %6 : vector<16x128xf32>
    %8 = arith.truncf %7 : vector<16x128xf32> to vector<16x128xbf16>
    %c0_6 = arith.constant 0 : index
    %c0_7 = arith.constant 0 : index
    %9 = vector.load %arg4[%c0_6, %c0_7] : memref<128x128xbf16, #tpu.memory_space<vmem>>, vector<128x128xbf16>
    %cst_8 = arith.constant dense<0.000000e+00> : vector<16x128xf32>
    %10 = tpu.matmul %8, %9, %cst_8 {dimension_numbers = #tpu.dot_dimension_numbers<[1], [0], [0], [1], [0, 0, 1, 1], [], []>} : vector<16x128xbf16>, vector<128x128xbf16>, vector<16x128xf32> -> vector<16x128xf32>
    %c0_9 = arith.constant 0 : index
    %c0_10 = arith.constant 0 : index
    %11 = vector.load %arg5[%c0_9, %c0_10] : memref<1x128xf32, #tpu.memory_space<vmem>>, vector<1x128xf32>
    %12 = vector.broadcast %11 : vector<1x128xf32> to vector<16x128xf32>
    %13 = arith.addf %10, %12 : vector<16x128xf32>
    %cst_11 = arith.constant 0.000000e+00 : f32
    %14 = vector.broadcast %cst_11 : f32 to vector<16x128xf32>
    %15 = arith.maximumf %13, %14 : vector<16x128xf32>
    %16 = arith.truncf %15 : vector<16x128xf32> to vector<16x128xbf16>
    %c0_12 = arith.constant 0 : index
    %c0_13 = arith.constant 0 : index
    %17 = vector.load %arg6[%c0_12, %c0_13] : memref<128x128xbf16, #tpu.memory_space<vmem>>, vector<128x128xbf16>
    %cst_14 = arith.constant dense<0.000000e+00> : vector<16x128xf32>
    %18 = tpu.matmul %16, %17, %cst_14 {dimension_numbers = #tpu.dot_dimension_numbers<[1], [0], [0], [1], [0, 0, 1, 1], [], []>} : vector<16x128xbf16>, vector<128x128xbf16>, vector<16x128xf32> -> vector<16x128xf32>
    %c0_15 = arith.constant 0 : index
    %c0_16 = arith.constant 0 : index
    %19 = vector.load %arg7[%c0_15, %c0_16] : memref<1x128xf32, #tpu.memory_space<vmem>>, vector<1x128xf32>
    %20 = vector.broadcast %19 : vector<1x128xf32> to vector<16x128xf32>
    %21 = arith.addf %18, %20 : vector<16x128xf32>
    %cst_17 = arith.constant dense<0.000000e+00> : vector<16xf32>
    %22 = vector.multi_reduction <add>, %21, %cst_17 [1] : vector<16x128xf32> to vector<16xf32>
    %23 = vector.shape_cast %22 : vector<16xf32> to vector<16x1xf32>
    %c0_18 = arith.constant 0 : index
    %c0_19 = arith.constant 0 : index
    %24 = vector.load %arg8[%c0_18, %c0_19] : memref<16x1xf32, #tpu.memory_space<vmem>>, vector<16x1xf32>
    tpu.vector_store %arg8[%c0_18, %c0_19], %23 {strides = array<i32>} : memref<16x1xf32, #tpu.memory_space<vmem>>, vector<16x1xf32>,
    return
  }
  func.func @transform_0(%arg0: i32) -> (i32, i32) {
    %c0_i32 = arith.constant 0 : i32
    %c0_i32_0 = arith.constant 0 : i32
    return %arg0, %c0_i32 : i32, i32
  }
  func.func @transform_1(%arg0: i32) -> (i32, i32) {
    %c0_i32 = arith.constant 0 : i32
    %c0_i32_0 = arith.constant 0 : i32
    %c0_i32_1 = arith.constant 0 : i32
    return %c0_i32, %c0_i32_0 : i32, i32
  }
  func.func @transform_2(%arg0: i32) -> (i32, i32) {
    %c0_i32 = arith.constant 0 : i32
    %c0_i32_0 = arith.constant 0 : i32
    %c0_i32_1 = arith.constant 0 : i32
    return %c0_i32, %c0_i32_0 : i32, i32
  }
  func.func @transform_3(%arg0: i32) -> (i32, i32) {
    %c0_i32 = arith.constant 0 : i32
    %c0_i32_0 = arith.constant 0 : i32
    %c0_i32_1 = arith.constant 0 : i32
    return %c0_i32, %c0_i32_0 : i32, i32
  }
  func.func @transform_4(%arg0: i32) -> (i32, i32) {
    %c0_i32 = arith.constant 0 : i32
    %c0_i32_0 = arith.constant 0 : i32
    %c0_i32_1 = arith.constant 0 : i32
    return %c0_i32, %c0_i32_0 : i32, i32
  }
  func.func @transform_5(%arg0: i32) -> (i32, i32) {
    %c0_i32 = arith.constant 0 : i32
    %c0_i32_0 = arith.constant 0 : i32
    %c0_i32_1 = arith.constant 0 : i32
    return %c0_i32, %c0_i32_0 : i32, i32
  }
  func.func @transform_6(%arg0: i32) -> (i32, i32) {
    %c0_i32 = arith.constant 0 : i32
    %c0_i32_0 = arith.constant 0 : i32
    %c0_i32_1 = arith.constant 0 : i32
    return %c0_i32, %c0_i32_0 : i32, i32
  }
  func.func @transform_7(%arg0: i32) -> (i32, i32) {
    %c0_i32 = arith.constant 0 : i32
    %c0_i32_0 = arith.constant 0 : i32
    return %arg0, %c0_i32 : i32, i32
  }
}

module attributes {stable_mosaic.version = 11 : i64} {
  func.func @kernel(%arg0: i32, %arg1: memref<16x32xbf16, #tpu.memory_space<vmem>>, %arg2: memref<32x128xbf16, #tpu.memory_space<vmem>>, %arg3: memref<1x128xf32, #tpu.memory_space<vmem>>, %arg4: memref<128x128xbf16, #tpu.memory_space<vmem>>, %arg5: memref<1x128xf32, #tpu.memory_space<vmem>>, %arg6: memref<128x128xbf16, #tpu.memory_space<vmem>>, %arg7: memref<1x128xf32, #tpu.memory_space<vmem>>, %arg8: memref<16x1xf32, #tpu.memory_space<vmem>>) attributes {dimension_semantics = [#tpu.dimension_semantics<parallel>], iteration_bounds = array<i64: 1>, scalar_prefetch = 0 : i64, scratch_operands = 0 : i64, tpu.core_type = #tpu.core_type<tc>, window_params = [{transform_indices = @transform_0, window_bounds = array<i64: 16, 32>}, {pipeline_mode = #tpu.pipeline_mode<synchronous>, transform_indices = @transform_1, window_bounds = array<i64: 32, 128>}, {pipeline_mode = #tpu.pipeline_mode<synchronous>, transform_indices = @transform_2, window_bounds = array<i64: 1, 128>}, {pipeline_mode = #tpu.pipeline_mode<synchronous>, transform_indices = @transform_3, window_bounds = array<i64: 128, 128>}, {pipeline_mode = #tpu.pipeline_mode<synchronous>, transform_indices = @transform_4, window_bounds = array<i64: 1, 128>}, {pipeline_mode = #tpu.pipeline_mode<synchronous>, transform_indices = @transform_5, window_bounds = array<i64: 128, 128>}, {pipeline_mode = #tpu.pipeline_mode<synchronous>, transform_indices = @transform_6, window_bounds = array<i64: 1, 128>}, {transform_indices = @transform_7, window_bounds = array<i64: 16, 1>}]} {
    %c0 = arith.constant 0 : index
    %c0_0 = arith.constant 0 : index
    %0 = vector.load %arg1[%c0, %c0_0] : memref<16x32xbf16, #tpu.memory_space<vmem>>, vector<16x32xbf16>
    %c0_1 = arith.constant 0 : index
    %c0_2 = arith.constant 0 : index
    %1 = vector.load %arg2[%c0_1, %c0_2] : memref<32x128xbf16, #tpu.memory_space<vmem>>, vector<32x128xbf16>
    %cst = arith.constant dense<0.000000e+00> : vector<16x128xf32>
    %2 = tpu.matmul %0, %1, %cst {dimension_numbers = #tpu.dot_dimension_numbers<[1], [0], [0], [1], [0, 0, 1, 1], [], []>} : vector<16x32xbf16>, vector<32x128xbf16>, vector<16x128xf32> -> vector<16x128xf32>
    %c0_3 = arith.constant 0 : index
    %c0_4 = arith.constant 0 : index
    %3 = vector.load %arg3[%c0_3, %c0_4] : memref<1x128xf32, #tpu.memory_space<vmem>>, vector<1x128xf32>
    %4 = vector.broadcast %3 : vector<1x128xf32> to vector<16x128xf32>
    %5 = arith.addf %2, %4 : vector<16x128xf32>
    %cst_5 = arith.constant 0.000000e+00 : f32
    %6 = vector.broadcast %cst_5 : f32 to vector<16x128xf32>
    %7 = arith.maximumf %5, %6 : vector<16x128xf32>
    %8 = arith.truncf %7 : vector<16x128xf32> to vector<16x128xbf16>
    %c0_6 = arith.constant 0 : index
    %c0_7 = arith.constant 0 : index
    %9 = vector.load %arg4[%c0_6, %c0_7] : memref<128x128xbf16, #tpu.memory_space<vmem>>, vector<128x128xbf16>
    %cst_8 = arith.constant dense<0.000000e+00> : vector<16x128xf32>
    %10 = tpu.matmul %8, %9, %cst_8 {dimension_numbers = #tpu.dot_dimension_numbers<[1], [0], [0], [1], [0, 0, 1, 1], [], []>} : vector<16x128xbf16>, vector<128x128xbf16>, vector<16x128xf32> -> vector<16x128xf32>
    %c0_9 = arith.constant 0 : index
    %c0_10 = arith.constant 0 : index
    %11 = vector.load %arg5[%c0_9, %c0_10] : memref<1x128xf32, #tpu.memory_space<vmem>>, vector<1x128xf32>
    %12 = vector.broadcast %11 : vector<1x128xf32> to vector<16x128xf32>
    %13 = arith.addf %10, %12 : vector<16x128xf32>
    %cst_11 = arith.constant 0.000000e+00 : f32
    %14 = vector.broadcast %cst_11 : f32 to vector<16x128xf32>
    %15 = arith.maximumf %13, %14 : vector<16x128xf32>
    %16 = arith.truncf %15 : vector<16x128xf32> to vector<16x128xbf16>
    %c0_12 = arith.constant 0 : index
    %c0_13 = arith.constant 0 : index
    %17 = vector.load %arg6[%c0_12, %c0_13] : memref<128x128xbf16, #tpu.memory_space<vmem>>, vector<128x128xbf16>
    %cst_14 = arith.constant dense<0.000000e+00> : vector<16x128xf32>
    %18 = tpu.matmul %16, %17, %cst_14 {dimension_numbers = #tpu.dot_dimension_numbers<[1], [0], [0], [1], [0, 0, 1, 1], [], []>} : vector<16x128xbf16>, vector<128x128xbf16>, vector<16x128xf32> -> vector<16x128xf32>
    %c0_15 = arith.constant 0 : index
    %c0_16 = arith.constant 0 : index
    %19 = vector.load %arg7[%c0_15, %c0_16] : memref<1x128xf32, #tpu.memory_space<vmem>>, vector<1x128xf32>
    %20 = vector.broadcast %19 : vector<1x128xf32> to vector<16x128xf32>
    %21 = arith.addf %18, %20 : vector<16x128xf32>
    %cst_17 = arith.constant dense<0.000000e+00> : vector<16xf32>
    %22 = vector.multi_reduction <add>, %21, %cst_17 [1] : vector<16x128xf32> to vector<16xf32>
    %23 = vector.shape_cast %22 : vector<16xf32> to vector<16x1xf32>
    %c0_18 = arith.constant 0 : index
    %c0_19 = arith.constant 0 : index
    %24 = vector.load %arg8[%c0_18, %c0_19] : memref<16x1xf32, #tpu.memory_space<vmem>>, vector<16x1xf32>
    tpu.vector_store %arg8[%c0_18, %c0_19], %23 {strides = array<i32>} : memref<16x1xf32, #tpu.memory_space<vmem>>, vector<16x1xf32>,
    return
  }
  func.func @transform_0(%arg0: i32) -> (i32, i32) {
    %c0_i32 = arith.constant 0 : i32
    %c0_i32_0 = arith.constant 0 : i32
    return %arg0, %c0_i32 : i32, i32
  }
  func.func @transform_1(%arg0: i32) -> (i32, i32) {
    %c0_i32 = arith.constant 0 : i32
    %c0_i32_0 = arith.constant 0 : i32
    %c0_i32_1 = arith.constant 0 : i32
    return %c0_i32, %c0_i32_0 : i32, i32
  }
  func.func @transform_2(%arg0: i32) -> (i32, i32) {
    %c0_i32 = arith.constant 0 : i32
    %c0_i32_0 = arith.constant 0 : i32
    %c0_i32_1 = arith.constant 0 : i32
    return %c0_i32, %c0_i32_0 : i32, i32
  }
  func.func @transform_3(%arg0: i32) -> (i32, i32) {
    %c0_i32 = arith.constant 0 : i32
    %c0_i32_0 = arith.constant 0 : i32
    %c0_i32_1 = arith.constant 0 : i32
    return %c0_i32, %c0_i32_0 : i32, i32
  }
  func.func @transform_4(%arg0: i32) -> (i32, i32) {
    %c0_i32 = arith.constant 0 : i32
    %c0_i32_0 = arith.constant 0 : i32
    %c0_i32_1 = arith.constant 0 : i32
    return %c0_i32, %c0_i32_0 : i32, i32
  }
  func.func @transform_5(%arg0: i32) -> (i32, i32) {
    %c0_i32 = arith.constant 0 : i32
    %c0_i32_0 = arith.constant 0 : i32
    %c0_i32_1 = arith.constant 0 : i32
    return %c0_i32, %c0_i32_0 : i32, i32
  }
  func.func @transform_6(%arg0: i32) -> (i32, i32) {
    %c0_i32 = arith.constant 0 : i32
    %c0_i32_0 = arith.constant 0 : i32
    %c0_i32_1 = arith.constant 0 : i32
    return %c0_i32, %c0_i32_0 : i32, i32
  }
  func.func @transform_7(%arg0: i32) -> (i32, i32) {
    %c0_i32 = arith.constant 0 : i32
    %c0_i32_0 = arith.constant 0 : i32
    return %arg0, %c0_i32 : i32, i32
  }
}

</mosaic_0001>

<llo_original>
// kernel: tpu_custom_call.1
$region0: #{tpu_custom_call.1}
  #allocation0 [shape = 'u32[]', space=smem, size = 0x4, offset = 0x4, fixed_abs, tag = 'smem constant byte address 0x4 - core index']
  #allocation1 [shape = 'u32[144,128]{1,0:T(1,128)}', space=vmem, size = 0x12000, scoped, tag = 'internal scratch']
  %s0 = inlined_call_operand.hbm [shape: bf16[16,32], index: 0, kind: input, shape index: {}]
  %s1 = inlined_call_operand.hbm [shape: bf16[32,128], index: 1, kind: input, shape index: {}]
  %s2 = inlined_call_operand.vmem [shape: f32[1,128], index: 2, kind: input, shape index: {}]
  %s3 = inlined_call_operand.hbm [shape: bf16[128,128], index: 3, kind: input, shape index: {}]
  %s4 = inlined_call_operand.vmem [shape: f32[1,128], index: 4, kind: input, shape index: {}]
  %s5 = inlined_call_operand.hbm [shape: bf16[128,128], index: 5, kind: input, shape index: {}]
  %s6 = inlined_call_operand.vmem [shape: f32[1,128], index: 6, kind: input, shape index: {}]
  %s7 = inlined_call_operand.vmem [shape: f32[16,1], index: 7, kind: output, shape index: {}]
  %s8 = sld [smem:[#allocation0]]
  $region54: #{tpu_custom_call.1} parent=0
    _
  %s10 = ssub.s32 1, %s8
  %s11 = scalar_select 0, %s10, %s8
  $region1: #{tpu_custom_call.1} parent=0
    #allocation2 [shape = 'u8[4096]{0}', space=vmem, size = 0x1000, scoped, tag = 'input window, operand 0, single buffered']
    #allocation3 [shape = 's32[1]{0}', space=sflag, size = 0x4, scoped, tag = 'scoped memory for tpu_custom_call.1']
    #allocation4 [shape = 'u8[8192]{0}', space=vmem, size = 0x2000, scoped, tag = 'input window, operand 1, single buffered']
    #allocation5 [shape = 's32[1]{0}', space=sflag, size = 0x4, scoped, tag = 'scoped memory for tpu_custom_call.1']
    #allocation6 [shape = 'u8[32768]{0}', space=vmem, size = 0x8000, scoped, tag = 'input window, operand 3, single buffered']
    #allocation7 [shape = 'u8[32768]{0}', space=vmem, size = 0x8000, scoped, tag = 'input window, operand 5, single buffered']
    #allocation8 [shape = 's32[1]{0}', space=sflag, size = 0x4, scoped, tag = 'scoped memory for tpu_custom_call.1']
    %12 = vsyncpa [#allocation3], 0
    %13 = vsyncpa [#allocation5], 0
    %14 = vsyncpa [#allocation8], 0
    // Predicated region
    $region2: #{tpu_custom_call.1} parent=1 // pred_check
      _
    $region3: #{tpu_custom_call.1} parent=1 // pred_check_branch
      %16 = sbr.rel (0) target = $region5
    $region4: #{tpu_custom_call.1} parent=1 // pred_region
      %s18 = ssub.s32 128, 128
      %19 = vsyncadd [#allocation3], %s18
      %s20 = sshll.u32 [#allocation2], 4
      %s21 = int_to_ptr.vmem [resolvable:$true] %s20
      %26 = dma.hbm_to_vmem [thread:$0]  %s0, 128, %s21, [#allocation3], 64, 64, 4
    $region5: #{tpu_custom_call.1} parent=1 // pred_fallthru
      _
    // Predicated region
    $region6: #{tpu_custom_call.1} parent=1 // pred_check
      _
    $region7: #{tpu_custom_call.1} parent=1 // pred_check_branch
      %28 = sbr.rel (0) target = $region9
    $region8: #{tpu_custom_call.1} parent=1 // pred_region
      %s30 = ssub.s32 256, 256
      %31 = vsyncadd [#allocation5], %s30
      %s32 = sshll.u32 [#allocation4], 4
      %s33 = int_to_ptr.vmem [resolvable:$true] %s32
      %38 = dma.hbm_to_vmem [thread:$0]  %s1, 256, %s33, [#allocation5], 64, 64, 4
    $region9: #{tpu_custom_call.1} parent=1 // pred_fallthru
      _
    // Predicated region
    $region10: #{tpu_custom_call.1} parent=1 // pred_check
      _
    $region11: #{tpu_custom_call.1} parent=1 // pred_check_branch
      %40 = sbr.rel (0) target = $region13
    $region12: #{tpu_custom_call.1} parent=1 // pred_region
      _
    $region13: #{tpu_custom_call.1} parent=1 // pred_fallthru
      _
    // Predicated region
    $region14: #{tpu_custom_call.1} parent=1 // pred_check
      _
    $region15: #{tpu_custom_call.1} parent=1 // pred_check_branch
      %42 = sbr.rel (0) target = $region17
    $region16: #{tpu_custom_call.1} parent=1 // pred_region
      %s44 = ssub.s32 1024, 1024
      %45 = vsyncadd [#allocation5], %s44
      %s46 = sshll.u32 [#allocation6], 4
      %s47 = int_to_ptr.vmem [resolvable:$true] %s46
      %52 = dma.hbm_to_vmem [thread:$0]  %s3, 1024, %s47, [#allocation5], 64, 64, 4
    $region17: #{tpu_custom_call.1} parent=1 // pred_fallthru
      _
    // Predicated region
    $region18: #{tpu_custom_call.1} parent=1 // pred_check
      _
    $region19: #{tpu_custom_call.1} parent=1 // pred_check_branch
      %54 = sbr.rel (0) target = $region21
    $region20: #{tpu_custom_call.1} parent=1 // pred_region
      _
    $region21: #{tpu_custom_call.1} parent=1 // pred_fallthru
      _
    // Predicated region
    $region22: #{tpu_custom_call.1} parent=1 // pred_check
      _
    $region23: #{tpu_custom_call.1} parent=1 // pred_check_branch
      %56 = sbr.rel (0) target = $region25
    $region24: #{tpu_custom_call.1} parent=1 // pred_region
      %s58 = ssub.s32 1024, 1024
      %59 = vsyncadd [#allocation8], %s58
      %s60 = sshll.u32 [#allocation7], 4
      %s61 = int_to_ptr.vmem [resolvable:$true] %s60
      %66 = dma.hbm_to_vmem [thread:$0]  %s5, 1024, %s61, [#allocation8], 64, 64, 4
    $region25: #{tpu_custom_call.1} parent=1 // pred_fallthru
      _
    // Predicated region
    $region26: #{tpu_custom_call.1} parent=1 // pred_check
      _
    $region27: #{tpu_custom_call.1} parent=1 // pred_check_branch
      %68 = sbr.rel (0) target = $region29
    $region28: #{tpu_custom_call.1} parent=1 // pred_region
      _
    $region29: #{tpu_custom_call.1} parent=1 // pred_fallthru
      _
    // Predicated region
    $region30: #{tpu_custom_call.1} parent=1 // pred_check
      _
    $region31: #{tpu_custom_call.1} parent=1 // pred_check_branch
      %70 = sbr.rel (0) target = $region33
    $region32: #{tpu_custom_call.1} parent=1 // pred_region
      %71 = dma.done [#allocation3], 128
    $region33: #{tpu_custom_call.1} parent=1 // pred_fallthru
      _
    // Predicated region
    $region34: #{tpu_custom_call.1} parent=1 // pred_check
      _
    $region35: #{tpu_custom_call.1} parent=1 // pred_check_branch
      %73 = sbr.rel (0) target = $region37
    $region36: #{tpu_custom_call.1} parent=1 // pred_region
      %74 = dma.done [#allocation5], 256
    $region37: #{tpu_custom_call.1} parent=1 // pred_fallthru
      _
    // Predicated region
    $region38: #{tpu_custom_call.1} parent=1 // pred_check
      _
    $region39: #{tpu_custom_call.1} parent=1 // pred_check_branch
      %76 = sbr.rel (0) target = $region41
    $region40: #{tpu_custom_call.1} parent=1 // pred_region
      %77 = dma.done [#allocation5], 1024
    $region41: #{tpu_custom_call.1} parent=1 // pred_fallthru
      _
    // Predicated region
    $region42: #{tpu_custom_call.1} parent=1 // pred_check
      _
    $region43: #{tpu_custom_call.1} parent=1 // pred_check_branch
      %79 = sbr.rel (0) target = $region45
    $region44: #{tpu_custom_call.1} parent=1 // pred_region
      %80 = dma.done [#allocation8], 1024
    $region45: #{tpu_custom_call.1} parent=1 // pred_fallthru
      _
    %v82 = vld [vmem:[#allocation2] sm:$0xf]
    %v83 = vld [vmem:[#allocation2 + $0x4] sm:$0xf]
    %v84 = vld [vmem:[#allocation4] sm:$0xf]
    %v85 = vld [vmem:[#allocation4 + $0x4] sm:$0xf]
    %v86 = vld [vmem:[#allocation4 + $0x8] sm:$0xf]
    %v87 = vld [vmem:[#allocation4 + $0xc] sm:$0xf]
    %v88 = vld [vmem:[%s2] sm:$0x1]
    %v90 = vlaneseq
    %v91 = vshrl.u32 %v90, 7
    %v92 = vsub.s32 0, %v91
    %v93 = vrot.slane %v88, %v92
    %v97 = vunpack.c.l.b16 %v82
    %v98 = vunpack.c.l.b16 %v83
    %v99 = vpack.c.b16 %v98, %v97
    %v104 = vunpack.c.l.b16 %v84
    %v105 = vunpack.c.l.b16 %v85
    %v106 = vunpack.c.l.b16 %v86
    %v107 = vunpack.c.l.b16 %v87
    %v108 = vpack.c.b16 %v105, %v104
    %v109 = vpack.c.b16 %v107, %v106
    %vm112 = vcmask 261120
    %v114 = vsel %vm112, %v99, 0
    %116 = vmatprep.subr.bf16.mxu0 0
    %117 = vmatpush1.bf16.msra.mxu0 0
    %118 = vmatprep.subr.bf16.mxu0 0
    %119 = vmatpush1.bf16.msra.mxu0 0
    %120 = vmatprep.subr.bf16.mxu0 0
    %121 = vmatpush1.bf16.msra.mxu0 0
    %122 = vmatprep.subr.bf16.mxu0 0
    %123 = vmatpush1.bf16.msra.mxu0 0
    %124 = vmatprep.subr.bf16.mxu0 0
    %125 = vmatpush1.bf16.msra.mxu0 0
    %126 = vmatprep.subr.bf16.mxu0 0
    %127 = vmatpush1.bf16.msra.mxu0 0
    %128 = vmatprep.subr.bf16.mxu0 0
    %129 = vmatpush1.bf16.msra.mxu0 %v109
    %130 = vmatprep.subr.bf16.mxu0 0
    %131 = vmatpush1.bf16.msra.mxu0 %v108
    %132 = vmatprep.subr.bf16.mxu0 0
    %133 = vmatpush2.bf16.msra.mxu0 0
    %134 = vmatprep.subr.bf16.mxu0 0
    %135 = vmatpush2.bf16.msra.mxu0 0
    %136 = vmatprep.subr.bf16.mxu0 0
    %137 = vmatpush2.bf16.msra.mxu0 0
    %138 = vmatprep.subr.bf16.mxu0 0
    %139 = vmatpush2.bf16.msra.mxu0 0
    %140 = vmatprep.subr.bf16.mxu0 0
    %141 = vmatpush2.bf16.msra.mxu0 0
    %142 = vmatprep.subr.bf16.mxu0 0
    %143 = vmatpush2.bf16.msra.mxu0 0
    %144 = vmatprep.subr.bf16.mxu0 0
    %145 = vmatpush2.bf16.msra.mxu0 0
    %146 = vmatprep.subr.bf16.mxu0 0
    %147 = vmatpush2.bf16.msra.mxu0 0
    %148 = vmatprep.mubr.bf16.mxu0 0
    %149 = vmatmul.mubr.bf16.gmra.mxu0 %v114
    %v150 = vpop.f32.mrf.mxu0
    %v151 = vadd.f32 %v93, %v150
    %v152 = vpop.f32.mrf.mxu0
    %v153 = vpop.f32.mrf.mxu0
    %v154 = vadd.f32 %v93, %v153
    %v155 = vpop.f32.mrf.mxu0
    %156 = vdwg.mxu0
    %v157 = vmax.f32 %v151, 0.0
    %v158 = vmax.f32 %v154, 0.0
    %v159 = vpack.c.bf16 %v158, %v157
    %v160 = vld [vmem:[#allocation6] sm:$0xf]
    %v161 = vld [vmem:[#allocation6 + $0x4] sm:$0xf]
    %v162 = vld [vmem:[#allocation6 + $0x8] sm:$0xf]
    %v163 = vld [vmem:[#allocation6 + $0xc] sm:$0xf]
    %v164 = vld [vmem:[#allocation6 + $0x10] sm:$0xf]
    %v165 = vld [vmem:[#allocation6 + $0x14] sm:$0xf]
    %v166 = vld [vmem:[#allocation6 + $0x18] sm:$0xf]
    %v167 = vld [vmem:[#allocation6 + $0x1c] sm:$0xf]
    %v168 = vld [vmem:[#allocation6 + $0x20] sm:$0xf]
    %v169 = vld [vmem:[#allocation6 + $0x24] sm:$0xf]
    %v170 = vld [vmem:[#allocation6 + $0x28] sm:$0xf]
    %v171 = vld [vmem:[#allocation6 + $0x2c] sm:$0xf]
    %v172 = vld [vmem:[#allocation6 + $0x30] sm:$0xf]
    %v173 = vld [vmem:[#allocation6 + $0x34] sm:$0xf]
    %v174 = vld [vmem:[#allocation6 + $0x38] sm:$0xf]
    %v175 = vld [vmem:[#allocation6 + $0x3c] sm:$0xf]
    %v176 = vld [vmem:[%s4] sm:$0x1]
    %v178 = vlaneseq
    %v179 = vshrl.u32 %v178, 7
    %v180 = vsub.s32 0, %v179
    %v181 = vrot.slane %v176, %v180
    %v199 = vunpack.c.l.b16 %v160
    %v200 = vunpack.c.l.b16 %v161
    %v201 = vunpack.c.l.b16 %v162
    %v202 = vunpack.c.l.b16 %v163
    %v203 = vunpack.c.l.b16 %v164
    %v204 = vunpack.c.l.b16 %v165
    %v205 = vunpack.c.l.b16 %v166
    %v206 = vunpack.c.l.b16 %v167
    %v207 = vunpack.c.l.b16 %v168
    %v208 = vunpack.c.l.b16 %v169
    %v209 = vunpack.c.l.b16 %v170
    %v210 = vunpack.c.l.b16 %v171
    %v211 = vunpack.c.l.b16 %v172
    %v212 = vunpack.c.l.b16 %v173
    %v213 = vunpack.c.l.b16 %v174
    %v214 = vunpack.c.l.b16 %v175
    %v215 = vpack.c.b16 %v200, %v199
    %v216 = vpack.c.b16 %v202, %v201
    %v217 = vpack.c.b16 %v204, %v203
    %v218 = vpack.c.b16 %v206, %v205
    %v219 = vpack.c.b16 %v208, %v207
    %v220 = vpack.c.b16 %v210, %v209
    %v221 = vpack.c.b16 %v212, %v211
    %v222 = vpack.c.b16 %v214, %v213
    %231 = vmatprep.subr.bf16.mxu0 0
    %232 = vmatpush1.bf16.msra.mxu0 %v222
    %233 = vmatprep.subr.bf16.mxu0 0
    %234 = vmatpush1.bf16.msra.mxu0 %v221
    %235 = vmatprep.subr.bf16.mxu0 0
    %236 = vmatpush1.bf16.msra.mxu0 %v220
    %237 = vmatprep.subr.bf16.mxu0 0
    %238 = vmatpush1.bf16.msra.mxu0 %v219
    %239 = vmatprep.subr.bf16.mxu0 0
    %240 = vmatpush1.bf16.msra.mxu0 %v218
    %241 = vmatprep.subr.bf16.mxu0 0
    %242 = vmatpush1.bf16.msra.mxu0 %v217
    %243 = vmatprep.subr.bf16.mxu0 0
    %244 = vmatpush1.bf16.msra.mxu0 %v216
    %245 = vmatprep.subr.bf16.mxu0 0
    %246 = vmatpush1.bf16.msra.mxu0 %v215
    %247 = vmatprep.subr.bf16.mxu0 0
    %248 = vmatpush2.bf16.msra.mxu0 0
    %249 = vmatprep.subr.bf16.mxu0 0
    %250 = vmatpush2.bf16.msra.mxu0 0
    %251 = vmatprep.subr.bf16.mxu0 0
    %252 = vmatpush2.bf16.msra.mxu0 0
    %253 = vmatprep.subr.bf16.mxu0 0
    %254 = vmatpush2.bf16.msra.mxu0 0
    %255 = vmatprep.subr.bf16.mxu0 0
    %256 = vmatpush2.bf16.msra.mxu0 0
    %257 = vmatprep.subr.bf16.mxu0 0
    %258 = vmatpush2.bf16.msra.mxu0 0
    %259 = vmatprep.subr.bf16.mxu0 0
    %260 = vmatpush2.bf16.msra.mxu0 0
    %261 = vmatprep.subr.bf16.mxu0 0
    %262 = vmatpush2.bf16.msra.mxu0 0
    %263 = vmatprep.mubr.bf16.mxu0 0
    %264 = vmatmul.mubr.bf16.gmra.mxu0 %v159
    %v265 = vpop.f32.mrf.mxu0
    %v266 = vadd.f32 %v181, %v265
    %v267 = vpop.f32.mrf.mxu0
    %v268 = vpop.f32.mrf.mxu0
    %v269 = vadd.f32 %v181, %v268
    %v270 = vpop.f32.mrf.mxu0
    %271 = vdwg.mxu0
    %v272 = vmax.f32 %v266, 0.0
    %v273 = vmax.f32 %v269, 0.0
    %v274 = vpack.c.bf16 %v273, %v272
    %v275 = vld [vmem:[#allocation7] sm:$0xf]
    %v276 = vld [vmem:[#allocation7 + $0x4] sm:$0xf]
    %v277 = vld [vmem:[#allocation7 + $0x8] sm:$0xf]
    %v278 = vld [vmem:[#allocation7 + $0xc] sm:$0xf]
    %v279 = vld [vmem:[#allocation7 + $0x10] sm:$0xf]
    %v280 = vld [vmem:[#allocation7 + $0x14] sm:$0xf]
    %v281 = vld [vmem:[#allocation7 + $0x18] sm:$0xf]
    %v282 = vld [vmem:[#allocation7 + $0x1c] sm:$0xf]
    %v283 = vld [vmem:[#allocation7 + $0x20] sm:$0xf]
    %v284 = vld [vmem:[#allocation7 + $0x24] sm:$0xf]
    %v285 = vld [vmem:[#allocation7 + $0x28] sm:$0xf]
    %v286 = vld [vmem:[#allocation7 + $0x2c] sm:$0xf]
    %v287 = vld [vmem:[#allocation7 + $0x30] sm:$0xf]
    %v288 = vld [vmem:[#allocation7 + $0x34] sm:$0xf]
    %v289 = vld [vmem:[#allocation7 + $0x38] sm:$0xf]
    %v290 = vld [vmem:[#allocation7 + $0x3c] sm:$0xf]
    %v291 = vld [vmem:[%s6] sm:$0x1]
    %v293 = vlaneseq
    %v294 = vshrl.u32 %v293, 7
    %v295 = vsub.s32 0, %v294
    %v296 = vrot.slane %v291, %v295
    %v314 = vunpack.c.l.b16 %v275
    %v315 = vunpack.c.l.b16 %v276
    %v316 = vunpack.c.l.b16 %v277
    %v317 = vunpack.c.l.b16 %v278
    %v318 = vunpack.c.l.b16 %v279
    %v319 = vunpack.c.l.b16 %v280
    %v320 = vunpack.c.l.b16 %v281
    %v321 = vunpack.c.l.b16 %v282
    %v322 = vunpack.c.l.b16 %v283
    %v323 = vunpack.c.l.b16 %v284
    %v324 = vunpack.c.l.b16 %v285
    %v325 = vunpack.c.l.b16 %v286
    %v326 = vunpack.c.l.b16 %v287
    %v327 = vunpack.c.l.b16 %v288
    %v328 = vunpack.c.l.b16 %v289
    %v329 = vunpack.c.l.b16 %v290
    %v330 = vpack.c.b16 %v315, %v314
    %v331 = vpack.c.b16 %v317, %v316
    %v332 = vpack.c.b16 %v319, %v318
    %v333 = vpack.c.b16 %v321, %v320
    %v334 = vpack.c.b16 %v323, %v322
    %v335 = vpack.c.b16 %v325, %v324
    %v336 = vpack.c.b16 %v327, %v326
    %v337 = vpack.c.b16 %v329, %v328
    %346 = vmatprep.subr.bf16.mxu0 0
    %347 = vmatpush1.bf16.msra.mxu0 %v337
    %348 = vmatprep.subr.bf16.mxu0 0
    %349 = vmatpush1.bf16.msra.mxu0 %v336
    %350 = vmatprep.subr.bf16.mxu0 0
    %351 = vmatpush1.bf16.msra.mxu0 %v335
    %352 = vmatprep.subr.bf16.mxu0 0
    %353 = vmatpush1.bf16.msra.mxu0 %v334
    %354 = vmatprep.subr.bf16.mxu0 0
    %355 = vmatpush1.bf16.msra.mxu0 %v333
    %356 = vmatprep.subr.bf16.mxu0 0
    %357 = vmatpush1.bf16.msra.mxu0 %v332
    %358 = vmatprep.subr.bf16.mxu0 0
    %359 = vmatpush1.bf16.msra.mxu0 %v331
    %360 = vmatprep.subr.bf16.mxu0 0
    %361 = vmatpush1.bf16.msra.mxu0 %v330
    %362 = vmatprep.subr.bf16.mxu0 0
    %363 = vmatpush2.bf16.msra.mxu0 0
    %364 = vmatprep.subr.bf16.mxu0 0
    %365 = vmatpush2.bf16.msra.mxu0 0
    %366 = vmatprep.subr.bf16.mxu0 0
    %367 = vmatpush2.bf16.msra.mxu0 0
    %368 = vmatprep.subr.bf16.mxu0 0
    %369 = vmatpush2.bf16.msra.mxu0 0
    %370 = vmatprep.subr.bf16.mxu0 0
    %371 = vmatpush2.bf16.msra.mxu0 0
    %372 = vmatprep.subr.bf16.mxu0 0
    %373 = vmatpush2.bf16.msra.mxu0 0
    %374 = vmatprep.subr.bf16.mxu0 0
    %375 = vmatpush2.bf16.msra.mxu0 0
    %376 = vmatprep.subr.bf16.mxu0 0
    %377 = vmatpush2.bf16.msra.mxu0 0
    %378 = vmatprep.mubr.bf16.mxu0 0
    %379 = vmatmul.mubr.bf16.gmra.mxu0 %v274
    %v380 = vpop.f32.mrf.mxu0
    %v381 = vadd.f32 %v296, %v380
    %v382 = vpop.f32.mrf.mxu0
    %v383 = vpop.f32.mrf.mxu0
    %v384 = vadd.f32 %v296, %v383
    %v385 = vpop.f32.mrf.mxu0
    %386 = vdwg.mxu0
    %387 = vadd.xlane.f32.xlu0 %v381
    %v388 = vpop.xlane.xlu0 %387
    %389 = vadd.xlane.f32.xlu0 %v384
    %v390 = vpop.xlane.xlu0 %389
    %vm391 = vcmask 7168
    %392 = vst.msk [vmem:[%s7] sm:$0xff] %vm391, %v388
    %393 = vst.msk [vmem:[%s7 + $0x8] sm:$0xff] %vm391, %v390
    // Predicated region
    $region46: #{tpu_custom_call.1} parent=1 // pred_check
      _
    $region47: #{tpu_custom_call.1} parent=1 // pred_check_branch
      %395 = sbr.rel (0) target = $region49
    $region48: #{tpu_custom_call.1} parent=1 // pred_region
      _
    $region49: #{tpu_custom_call.1} parent=1 // pred_fallthru
      _
    // Predicated region
    $region50: #{tpu_custom_call.1} parent=1 // pred_check
      _
    $region51: #{tpu_custom_call.1} parent=1 // pred_check_branch
      %397 = sbr.rel (0) target = $region53
    $region52: #{tpu_custom_call.1} parent=1 // pred_region
      _
    $region53: #{tpu_custom_call.1} parent=1 // pred_fallthru
      _
    %398 = vsyncpa [#allocation3], 1
    %399 = vsyncpa [#allocation5], 1
    %400 = vsyncpa [#allocation8], 1

// kernel: tpu_custom_call.1
$region0: #{tpu_custom_call.1}
  #allocation0 [shape = 'u32[]', space=smem, size = 0x4, offset = 0x4, fixed_abs, tag = 'smem constant byte address 0x4 - core index']
  #allocation1 [shape = 'u32[144,128]{1,0:T(1,128)}', space=vmem, size = 0x12000, scoped, tag = 'internal scratch']
  %s0 = inlined_call_operand.hbm [shape: bf16[16,32], index: 0, kind: input, shape index: {}]
  %s1 = inlined_call_operand.hbm [shape: bf16[32,128], index: 1, kind: input, shape index: {}]
  %s2 = inlined_call_operand.vmem [shape: f32[1,128], index: 2, kind: input, shape index: {}]
  %s3 = inlined_call_operand.hbm [shape: bf16[128,128], index: 3, kind: input, shape index: {}]
  %s4 = inlined_call_operand.vmem [shape: f32[1,128], index: 4, kind: input, shape index: {}]
  %s5 = inlined_call_operand.hbm [shape: bf16[128,128], index: 5, kind: input, shape index: {}]
  %s6 = inlined_call_operand.vmem [shape: f32[1,128], index: 6, kind: input, shape index: {}]
  %s7 = inlined_call_operand.vmem [shape: f32[16,1], index: 7, kind: output, shape index: {}]
  %s8 = sld [smem:[#allocation0]]
  $region54: #{tpu_custom_call.1} parent=0
    _
  %s10 = ssub.s32 1, %s8
  %s11 = scalar_select 0, %s10, %s8
  $region1: #{tpu_custom_call.1} parent=0
    #allocation2 [shape = 'u8[4096]{0}', space=vmem, size = 0x1000, scoped, tag = 'input window, operand 0, single buffered']
    #allocation3 [shape = 's32[1]{0}', space=sflag, size = 0x4, scoped, tag = 'scoped memory for tpu_custom_call.1']
    #allocation4 [shape = 'u8[8192]{0}', space=vmem, size = 0x2000, scoped, tag = 'input window, operand 1, single buffered']
    #allocation5 [shape = 's32[1]{0}', space=sflag, size = 0x4, scoped, tag = 'scoped memory for tpu_custom_call.1']
    #allocation6 [shape = 'u8[32768]{0}', space=vmem, size = 0x8000, scoped, tag = 'input window, operand 3, single buffered']
    #allocation7 [shape = 'u8[32768]{0}', space=vmem, size = 0x8000, scoped, tag = 'input window, operand 5, single buffered']
    #allocation8 [shape = 's32[1]{0}', space=sflag, size = 0x4, scoped, tag = 'scoped memory for tpu_custom_call.1']
    %12 = vsyncpa [#allocation3], 0
    %13 = vsyncpa [#allocation5], 0
    %14 = vsyncpa [#allocation8], 0
    // Predicated region
    $region2: #{tpu_custom_call.1} parent=1 // pred_check
      _
    $region3: #{tpu_custom_call.1} parent=1 // pred_check_branch
      %16 = sbr.rel (0) target = $region5
    $region4: #{tpu_custom_call.1} parent=1 // pred_region
      %s18 = ssub.s32 128, 128
      %19 = vsyncadd [#allocation3], %s18
      %s20 = sshll.u32 [#allocation2], 4
      %s21 = int_to_ptr.vmem [resolvable:$true] %s20
      %26 = dma.hbm_to_vmem [thread:$0]  %s0, 128, %s21, [#allocation3], 64, 64, 4
    $region5: #{tpu_custom_call.1} parent=1 // pred_fallthru
      _
    // Predicated region
    $region6: #{tpu_custom_call.1} parent=1 // pred_check
      _
    $region7: #{tpu_custom_call.1} parent=1 // pred_check_branch
      %28 = sbr.rel (0) target = $region9
    $region8: #{tpu_custom_call.1} parent=1 // pred_region
      %s30 = ssub.s32 256, 256
      %31 = vsyncadd [#allocation5], %s30
      %s32 = sshll.u32 [#allocation4], 4
      %s33 = int_to_ptr.vmem [resolvable:$true] %s32
      %38 = dma.hbm_to_vmem [thread:$0]  %s1, 256, %s33, [#allocation5], 64, 64, 4
    $region9: #{tpu_custom_call.1} parent=1 // pred_fallthru
      _
    // Predicated region
    $region10: #{tpu_custom_call.1} parent=1 // pred_check
      _
    $region11: #{tpu_custom_call.1} parent=1 // pred_check_branch
      %40 = sbr.rel (0) target = $region13
    $region12: #{tpu_custom_call.1} parent=1 // pred_region
      _
    $region13: #{tpu_custom_call.1} parent=1 // pred_fallthru
      _
    // Predicated region
    $region14: #{tpu_custom_call.1} parent=1 // pred_check
      _
    $region15: #{tpu_custom_call.1} parent=1 // pred_check_branch
      %42 = sbr.rel (0) target = $region17
    $region16: #{tpu_custom_call.1} parent=1 // pred_region
      %s44 = ssub.s32 1024, 1024
      %45 = vsyncadd [#allocation5], %s44
      %s46 = sshll.u32 [#allocation6], 4
      %s47 = int_to_ptr.vmem [resolvable:$true] %s46
      %52 = dma.hbm_to_vmem [thread:$0]  %s3, 1024, %s47, [#allocation5], 64, 64, 4
    $region17: #{tpu_custom_call.1} parent=1 // pred_fallthru
      _
    // Predicated region
    $region18: #{tpu_custom_call.1} parent=1 // pred_check
      _
    $region19: #{tpu_custom_call.1} parent=1 // pred_check_branch
      %54 = sbr.rel (0) target = $region21
    $region20: #{tpu_custom_call.1} parent=1 // pred_region
      _
    $region21: #{tpu_custom_call.1} parent=1 // pred_fallthru
      _
    // Predicated region
    $region22: #{tpu_custom_call.1} parent=1 // pred_check
      _
    $region23: #{tpu_custom_call.1} parent=1 // pred_check_branch
      %56 = sbr.rel (0) target = $region25
    $region24: #{tpu_custom_call.1} parent=1 // pred_region
      %s58 = ssub.s32 1024, 1024
      %59 = vsyncadd [#allocation8], %s58
      %s60 = sshll.u32 [#allocation7], 4
      %s61 = int_to_ptr.vmem [resolvable:$true] %s60
      %66 = dma.hbm_to_vmem [thread:$0]  %s5, 1024, %s61, [#allocation8], 64, 64, 4
    $region25: #{tpu_custom_call.1} parent=1 // pred_fallthru
      _
    // Predicated region
    $region26: #{tpu_custom_call.1} parent=1 // pred_check
      _
    $region27: #{tpu_custom_call.1} parent=1 // pred_check_branch
      %68 = sbr.rel (0) target = $region29
    $region28: #{tpu_custom_call.1} parent=1 // pred_region
      _
    $region29: #{tpu_custom_call.1} parent=1 // pred_fallthru
      _
    // Predicated region
    $region30: #{tpu_custom_call.1} parent=1 // pred_check
      _
    $region31: #{tpu_custom_call.1} parent=1 // pred_check_branch
      %70 = sbr.rel (0) target = $region33
    $region32: #{tpu_custom_call.1} parent=1 // pred_region
      %71 = dma.done [#allocation3], 128
    $region33: #{tpu_custom_call.1} parent=1 // pred_fallthru
      _
    // Predicated region
    $region34: #{tpu_custom_call.1} parent=1 // pred_check
      _
    $region35: #{tpu_custom_call.1} parent=1 // pred_check_branch
      %73 = sbr.rel (0) target = $region37
    $region36: #{tpu_custom_call.1} parent=1 // pred_region
      %74 = dma.done [#allocation5], 256
    $region37: #{tpu_custom_call.1} parent=1 // pred_fallthru
      _
    // Predicated region
    $region38: #{tpu_custom_call.1} parent=1 // pred_check
      _
    $region39: #{tpu_custom_call.1} parent=1 // pred_check_branch
      %76 = sbr.rel (0) target = $region41
    $region40: #{tpu_custom_call.1} parent=1 // pred_region
      %77 = dma.done [#allocation5], 1024
    $region41: #{tpu_custom_call.1} parent=1 // pred_fallthru
      _
    // Predicated region
    $region42: #{tpu_custom_call.1} parent=1 // pred_check
      _
    $region43: #{tpu_custom_call.1} parent=1 // pred_check_branch
      %79 = sbr.rel (0) target = $region45
    $region44: #{tpu_custom_call.1} parent=1 // pred_region
      %80 = dma.done [#allocation8], 1024
    $region45: #{tpu_custom_call.1} parent=1 // pred_fallthru
      _
    %v82 = vld [vmem:[#allocation2] sm:$0xf]
    %v83 = vld [vmem:[#allocation2 + $0x4] sm:$0xf]
    %v84 = vld [vmem:[#allocation4] sm:$0xf]
    %v85 = vld [vmem:[#allocation4 + $0x4] sm:$0xf]
    %v86 = vld [vmem:[#allocation4 + $0x8] sm:$0xf]
    %v87 = vld [vmem:[#allocation4 + $0xc] sm:$0xf]
    %v88 = vld [vmem:[%s2] sm:$0x1]
    %v90 = vlaneseq
    %v91 = vshrl.u32 %v90, 7
    %v92 = vsub.s32 0, %v91
    %v93 = vrot.slane %v88, %v92
    %v97 = vunpack.c.l.b16 %v82
    %v98 = vunpack.c.l.b16 %v83
    %v99 = vpack.c.b16 %v98, %v97
    %v104 = vunpack.c.l.b16 %v84
    %v105 = vunpack.c.l.b16 %v85
    %v106 = vunpack.c.l.b16 %v86
    %v107 = vunpack.c.l.b16 %v87
    %v108 = vpack.c.b16 %v105, %v104
    %v109 = vpack.c.b16 %v107, %v106
    %vm112 = vcmask 261120
    %v114 = vsel %vm112, %v99, 0
    %116 = vmatprep.subr.bf16.mxu0 0
    %117 = vmatpush1.bf16.msra.mxu0 0
    %118 = vmatprep.subr.bf16.mxu0 0
    %119 = vmatpush1.bf16.msra.mxu0 0
    %120 = vmatprep.subr.bf16.mxu0 0
    %121 = vmatpush1.bf16.msra.mxu0 0
    %122 = vmatprep.subr.bf16.mxu0 0
    %123 = vmatpush1.bf16.msra.mxu0 0
    %124 = vmatprep.subr.bf16.mxu0 0
    %125 = vmatpush1.bf16.msra.mxu0 0
    %126 = vmatprep.subr.bf16.mxu0 0
    %127 = vmatpush1.bf16.msra.mxu0 0
    %128 = vmatprep.subr.bf16.mxu0 0
    %129 = vmatpush1.bf16.msra.mxu0 %v109
    %130 = vmatprep.subr.bf16.mxu0 0
    %131 = vmatpush1.bf16.msra.mxu0 %v108
    %132 = vmatprep.subr.bf16.mxu0 0
    %133 = vmatpush2.bf16.msra.mxu0 0
    %134 = vmatprep.subr.bf16.mxu0 0
    %135 = vmatpush2.bf16.msra.mxu0 0
    %136 = vmatprep.subr.bf16.mxu0 0
    %137 = vmatpush2.bf16.msra.mxu0 0
    %138 = vmatprep.subr.bf16.mxu0 0
    %139 = vmatpush2.bf16.msra.mxu0 0
    %140 = vmatprep.subr.bf16.mxu0 0
    %141 = vmatpush2.bf16.msra.mxu0 0
    %142 = vmatprep.subr.bf16.mxu0 0
    %143 = vmatpush2.bf16.msra.mxu0 0
    %144 = vmatprep.subr.bf16.mxu0 0
    %145 = vmatpush2.bf16.msra.mxu0 0
    %146 = vmatprep.subr.bf16.mxu0 0
    %147 = vmatpush2.bf16.msra.mxu0 0
    %148 = vmatprep.mubr.bf16.mxu0 0
    %149 = vmatmul.mubr.bf16.gmra.mxu0 %v114
    %v150 = vpop.f32.mrf.mxu0
    %v151 = vadd.f32 %v93, %v150
    %v152 = vpop.f32.mrf.mxu0
    %v153 = vpop.f32.mrf.mxu0
    %v154 = vadd.f32 %v93, %v153
    %v155 = vpop.f32.mrf.mxu0
    %156 = vdwg.mxu0
    %v157 = vmax.f32 %v151, 0.0
    %v158 = vmax.f32 %v154, 0.0
    %v159 = vpack.c.bf16 %v158, %v157
    %v160 = vld [vmem:[#allocation6] sm:$0xf]
    %v161 = vld [vmem:[#allocation6 + $0x4] sm:$0xf]
    %v162 = vld [vmem:[#allocation6 + $0x8] sm:$0xf]
    %v163 = vld [vmem:[#allocation6 + $0xc] sm:$0xf]
    %v164 = vld [vmem:[#allocation6 + $0x10] sm:$0xf]
    %v165 = vld [vmem:[#allocation6 + $0x14] sm:$0xf]
    %v166 = vld [vmem:[#allocation6 + $0x18] sm:$0xf]
    %v167 = vld [vmem:[#allocation6 + $0x1c] sm:$0xf]
    %v168 = vld [vmem:[#allocation6 + $0x20] sm:$0xf]
    %v169 = vld [vmem:[#allocation6 + $0x24] sm:$0xf]
    %v170 = vld [vmem:[#allocation6 + $0x28] sm:$0xf]
    %v171 = vld [vmem:[#allocation6 + $0x2c] sm:$0xf]
    %v172 = vld [vmem:[#allocation6 + $0x30] sm:$0xf]
    %v173 = vld [vmem:[#allocation6 + $0x34] sm:$0xf]
    %v174 = vld [vmem:[#allocation6 + $0x38] sm:$0xf]
    %v175 = vld [vmem:[#allocation6 + $0x3c] sm:$0xf]
    %v176 = vld [vmem:[%s4] sm:$0x1]
    %v178 = vlaneseq
    %v179 = vshrl.u32 %v178, 7
    %v180 = vsub.s32 0, %v179
    %v181 = vrot.slane %v176, %v180
    %v199 = vunpack.c.l.b16 %v160
    %v200 = vunpack.c.l.b16 %v161
    %v201 = vunpack.c.l.b16 %v162
    %v202 = vunpack.c.l.b16 %v163
    %v203 = vunpack.c.l.b16 %v164
    %v204 = vunpack.c.l.b16 %v165
    %v205 = vunpack.c.l.b16 %v166
    %v206 = vunpack.c.l.b16 %v167
    %v207 = vunpack.c.l.b16 %v168
    %v208 = vunpack.c.l.b16 %v169
    %v209 = vunpack.c.l.b16 %v170
    %v210 = vunpack.c.l.b16 %v171
    %v211 = vunpack.c.l.b16 %v172
    %v212 = vunpack.c.l.b16 %v173
    %v213 = vunpack.c.l.b16 %v174
    %v214 = vunpack.c.l.b16 %v175
    %v215 = vpack.c.b16 %v200, %v199
    %v216 = vpack.c.b16 %v202, %v201
    %v217 = vpack.c.b16 %v204, %v203
    %v218 = vpack.c.b16 %v206, %v205
    %v219 = vpack.c.b16 %v208, %v207
    %v220 = vpack.c.b16 %v210, %v209
    %v221 = vpack.c.b16 %v212, %v211
    %v222 = vpack.c.b16 %v214, %v213
    %231 = vmatprep.subr.bf16.mxu0 0
    %232 = vmatpush1.bf16.msra.mxu0 %v222
    %233 = vmatprep.subr.bf16.mxu0 0
    %234 = vmatpush1.bf16.msra.mxu0 %v221
    %235 = vmatprep.subr.bf16.mxu0 0
    %236 = vmatpush1.bf16.msra.mxu0 %v220
    %237 = vmatprep.subr.bf16.mxu0 0
    %238 = vmatpush1.bf16.msra.mxu0 %v219
    %239 = vmatprep.subr.bf16.mxu0 0
    %240 = vmatpush1.bf16.msra.mxu0 %v218
    %241 = vmatprep.subr.bf16.mxu0 0
    %242 = vmatpush1.bf16.msra.mxu0 %v217
    %243 = vmatprep.subr.bf16.mxu0 0
    %244 = vmatpush1.bf16.msra.mxu0 %v216
    %245 = vmatprep.subr.bf16.mxu0 0
    %246 = vmatpush1.bf16.msra.mxu0 %v215
    %247 = vmatprep.subr.bf16.mxu0 0
    %248 = vmatpush2.bf16.msra.mxu0 0
    %249 = vmatprep.subr.bf16.mxu0 0
    %250 = vmatpush2.bf16.msra.mxu0 0
    %251 = vmatprep.subr.bf16.mxu0 0
    %252 = vmatpush2.bf16.msra.mxu0 0
    %253 = vmatprep.subr.bf16.mxu0 0
    %254 = vmatpush2.bf16.msra.mxu0 0
    %255 = vmatprep.subr.bf16.mxu0 0
    %256 = vmatpush2.bf16.msra.mxu0 0
    %257 = vmatprep.subr.bf16.mxu0 0
    %258 = vmatpush2.bf16.msra.mxu0 0
    %259 = vmatprep.subr.bf16.mxu0 0
    %260 = vmatpush2.bf16.msra.mxu0 0
    %261 = vmatprep.subr.bf16.mxu0 0
    %262 = vmatpush2.bf16.msra.mxu0 0
    %263 = vmatprep.mubr.bf16.mxu0 0
    %264 = vmatmul.mubr.bf16.gmra.mxu0 %v159
    %v265 = vpop.f32.mrf.mxu0
    %v266 = vadd.f32 %v181, %v265
    %v267 = vpop.f32.mrf.mxu0
    %v268 = vpop.f32.mrf.mxu0
    %v269 = vadd.f32 %v181, %v268
    %v270 = vpop.f32.mrf.mxu0
    %271 = vdwg.mxu0
    %v272 = vmax.f32 %v266, 0.0
    %v273 = vmax.f32 %v269, 0.0
    %v274 = vpack.c.bf16 %v273, %v272
    %v275 = vld [vmem:[#allocation7] sm:$0xf]
    %v276 = vld [vmem:[#allocation7 + $0x4] sm:$0xf]
    %v277 = vld [vmem:[#allocation7 + $0x8] sm:$0xf]
    %v278 = vld [vmem:[#allocation7 + $0xc] sm:$0xf]
    %v279 = vld [vmem:[#allocation7 + $0x10] sm:$0xf]
    %v280 = vld [vmem:[#allocation7 + $0x14] sm:$0xf]
    %v281 = vld [vmem:[#allocation7 + $0x18] sm:$0xf]
    %v282 = vld [vmem:[#allocation7 + $0x1c] sm:$0xf]
    %v283 = vld [vmem:[#allocation7 + $0x20] sm:$0xf]
    %v284 = vld [vmem:[#allocation7 + $0x24] sm:$0xf]
    %v285 = vld [vmem:[#allocation7 + $0x28] sm:$0xf]
    %v286 = vld [vmem:[#allocation7 + $0x2c] sm:$0xf]
    %v287 = vld [vmem:[#allocation7 + $0x30] sm:$0xf]
    %v288 = vld [vmem:[#allocation7 + $0x34] sm:$0xf]
    %v289 = vld [vmem:[#allocation7 + $0x38] sm:$0xf]
    %v290 = vld [vmem:[#allocation7 + $0x3c] sm:$0xf]
    %v291 = vld [vmem:[%s6] sm:$0x1]
    %v293 = vlaneseq
    %v294 = vshrl.u32 %v293, 7
    %v295 = vsub.s32 0, %v294
    %v296 = vrot.slane %v291, %v295
    %v314 = vunpack.c.l.b16 %v275
    %v315 = vunpack.c.l.b16 %v276
    %v316 = vunpack.c.l.b16 %v277
    %v317 = vunpack.c.l.b16 %v278
    %v318 = vunpack.c.l.b16 %v279
    %v319 = vunpack.c.l.b16 %v280
    %v320 = vunpack.c.l.b16 %v281
    %v321 = vunpack.c.l.b16 %v282
    %v322 = vunpack.c.l.b16 %v283
    %v323 = vunpack.c.l.b16 %v284
    %v324 = vunpack.c.l.b16 %v285
    %v325 = vunpack.c.l.b16 %v286
    %v326 = vunpack.c.l.b16 %v287
    %v327 = vunpack.c.l.b16 %v288
    %v328 = vunpack.c.l.b16 %v289
    %v329 = vunpack.c.l.b16 %v290
    %v330 = vpack.c.b16 %v315, %v314
    %v331 = vpack.c.b16 %v317, %v316
    %v332 = vpack.c.b16 %v319, %v318
    %v333 = vpack.c.b16 %v321, %v320
    %v334 = vpack.c.b16 %v323, %v322
    %v335 = vpack.c.b16 %v325, %v324
    %v336 = vpack.c.b16 %v327, %v326
    %v337 = vpack.c.b16 %v329, %v328
    %346 = vmatprep.subr.bf16.mxu0 0
    %347 = vmatpush1.bf16.msra.mxu0 %v337
    %348 = vmatprep.subr.bf16.mxu0 0
    %349 = vmatpush1.bf16.msra.mxu0 %v336
    %350 = vmatprep.subr.bf16.mxu0 0
    %351 = vmatpush1.bf16.msra.mxu0 %v335
    %352 = vmatprep.subr.bf16.mxu0 0
    %353 = vmatpush1.bf16.msra.mxu0 %v334
    %354 = vmatprep.subr.bf16.mxu0 0
    %355 = vmatpush1.bf16.msra.mxu0 %v333
    %356 = vmatprep.subr.bf16.mxu0 0
    %357 = vmatpush1.bf16.msra.mxu0 %v332
    %358 = vmatprep.subr.bf16.mxu0 0
    %359 = vmatpush1.bf16.msra.mxu0 %v331
    %360 = vmatprep.subr.bf16.mxu0 0
    %361 = vmatpush1.bf16.msra.mxu0 %v330
    %362 = vmatprep.subr.bf16.mxu0 0
    %363 = vmatpush2.bf16.msra.mxu0 0
    %364 = vmatprep.subr.bf16.mxu0 0
    %365 = vmatpush2.bf16.msra.mxu0 0
    %366 = vmatprep.subr.bf16.mxu0 0
    %367 = vmatpush2.bf16.msra.mxu0 0
    %368 = vmatprep.subr.bf16.mxu0 0
    %369 = vmatpush2.bf16.msra.mxu0 0
    %370 = vmatprep.subr.bf16.mxu0 0
    %371 = vmatpush2.bf16.msra.mxu0 0
    %372 = vmatprep.subr.bf16.mxu0 0
    %373 = vmatpush2.bf16.msra.mxu0 0
    %374 = vmatprep.subr.bf16.mxu0 0
    %375 = vmatpush2.bf16.msra.mxu0 0
    %376 = vmatprep.subr.bf16.mxu0 0
    %377 = vmatpush2.bf16.msra.mxu0 0
    %378 = vmatprep.mubr.bf16.mxu0 0
    %379 = vmatmul.mubr.bf16.gmra.mxu0 %v274
    %v380 = vpop.f32.mrf.mxu0
    %v381 = vadd.f32 %v296, %v380
    %v382 = vpop.f32.mrf.mxu0
    %v383 = vpop.f32.mrf.mxu0
    %v384 = vadd.f32 %v296, %v383
    %v385 = vpop.f32.mrf.mxu0
    %386 = vdwg.mxu0
    %387 = vadd.xlane.f32.xlu0 %v381
    %v388 = vpop.xlane.xlu0 %387
    %389 = vadd.xlane.f32.xlu0 %v384
    %v390 = vpop.xlane.xlu0 %389
    %vm391 = vcmask 7168
    %392 = vst.msk [vmem:[%s7] sm:$0xff] %vm391, %v388
    %393 = vst.msk [vmem:[%s7 + $0x8] sm:$0xff] %vm391, %v390
    // Predicated region
    $region46: #{tpu_custom_call.1} parent=1 // pred_check
      _
    $region47: #{tpu_custom_call.1} parent=1 // pred_check_branch
      %395 = sbr.rel (0) target = $region49
    $region48: #{tpu_custom_call.1} parent=1 // pred_region
      _
    $region49: #{tpu_custom_call.1} parent=1 // pred_fallthru
      _
    // Predicated region
    $region50: #{tpu_custom_call.1} parent=1 // pred_check
      _
    $region51: #{tpu_custom_call.1} parent=1 // pred_check_branch
      %397 = sbr.rel (0) target = $region53
    $region52: #{tpu_custom_call.1} parent=1 // pred_region
      _
    $region53: #{tpu_custom_call.1} parent=1 // pred_fallthru
      _
    %398 = vsyncpa [#allocation3], 1
    %399 = vsyncpa [#allocation5], 1
    %400 = vsyncpa [#allocation8], 1

</llo_original>
